<compile_context>
chip_gen: v5e
topology: v5e:2x2
jax: 0.10.0
libtpu: 0.0.40
codegen_flags: <defaults>
</compile_context>

<pallas_src>
import jax
import jax.numpy as jnp
from jax import lax
from jax.experimental import pallas as pl
from jax.experimental.pallas import tpu as pltpu

LEAKY_SLOPE = 0.01   # nn.LeakyReLU default negative_slope
BN_EPS = 1e-5        # nn.BatchNorm1d default eps

_SCOPED_VMEM_LIMIT = 32 * 1024 * 1024   # safe scoped limit on v5e/v6e/v7x
_VMEM_BUDGET = int(0.75 * _SCOPED_VMEM_LIMIT)


def _round_up(x, m):
    return ((x + m - 1) // m) * m


def _vmem_footprint(B, d_in, tn, out_bytes=4):
    """Rough per-call VMEM bytes for one grid step (incl. pipelining buffers)."""
    x_bytes = B * d_in * 2            # bf16 x, single-buffered (Buffered(1))
    w_bytes = 2 * d_in * tn * 2       # bf16 weight slab, double-buffered
    p_bytes = 2 * 8 * tn * 4          # packed bias/gamma/beta, double-buffered
    o_bytes = 2 * B * tn * out_bytes  # output tile, double-buffered
    tmp_bytes = 4 * B * tn * 4        # y / centered y / temporaries (f32)
    return x_bytes + w_bytes + p_bytes + o_bytes + tmp_bytes


def _pick_tile(d_pad, B, d_in):
    """Largest lane-dense tile that (a) divides d_pad, (b) fits the VMEM
    budget, and (c) leaves >= 2 tiles when d_pad >= 256 (v7x megacore)."""
    candidates = [t for t in (512, 256, 128) if d_pad % t == 0]
    if not candidates:
        candidates = [d_pad]
    for tn in candidates:
        if _vmem_footprint(B, d_in, tn) > _VMEM_BUDGET:
            continue
        if d_pad >= 256 and d_pad // tn < 2:
            continue   # keep at least 2 tiles so the parallel axis can shard
        return tn
    return candidates[-1]   # smallest candidate as a floor


# ---------------------------------------------------------------------------
# Kernel: one (B, tn) output tile per grid step.
#   x_ref : (B, D_in)  bf16   (grid-invariant, single-buffered)
#   wt_ref: (D_in, tn) bf16   (pre-transposed weight slab)
#   p_ref : (8, tn)    f32    row 0 = bias, row 1 = gamma, row 2 = beta
#   o_ref : (B, tn)    f32
# ---------------------------------------------------------------------------
def fcunit_kernel(x_ref, wt_ref, p_ref, o_ref):
    # ---- Linear: y = x @ W^T + b  (MXU, bf16 operands, f32 accumulate) ----
    y = jnp.dot(x_ref[...], wt_ref[...],
                preferred_element_type=jnp.float32)        # (B, tn) f32
    p = p_ref[...]                                         # (8, tn) f32
    bias = p[0:1, :]
    gamma = p[1:2, :]
    beta = p[2:3, :]
    y = y + bias

    # ---- LeakyReLU (VPU): max(y, slope*y) ----
    y = jnp.maximum(y, LEAKY_SLOPE * y)

    # ---- BatchNorm1d (training): two-pass biased batch stats over axis 0 ----
    inv_b = 1.0 / y.shape[0]
    mean = jnp.sum(y, axis=0, keepdims=True) * inv_b       # (1, tn)
    diff = y - mean                                        # centered
    var = jnp.sum(diff * diff, axis=0, keepdims=True) * inv_b
    inv_std = lax.rsqrt(var + BN_EPS)

    # ---- fold BN scale + affine into one multiply-add on centered y ----
    scale = gamma * inv_std                                # (1, tn)
    o_ref[...] = (diff * scale + beta).astype(o_ref.dtype)


# ---------------------------------------------------------------------------
# One-time parameter preparation (done at init, NOT per call).
# ---------------------------------------------------------------------------
def prepare_fcunit_params(weight, bias, gamma, beta):
    """weight: (D_out, D_in) PyTorch layout; bias/gamma/beta: (D_out,)."""
    d_out, d_in = weight.shape
    d_pad = _round_up(d_out, 128)                  # lane-dense feature dim

    # Pre-transpose to (D_in, D_pad), cast to bf16, zero-pad padded features.
    wt = jnp.zeros((d_in, d_pad), dtype=jnp.bfloat16)
    wt = wt.at[:, :d_out].set(weight.T.astype(jnp.bfloat16))

    # Pack bias/gamma/beta into one (8, d_pad) f32 array (one DMA per tile).
    # gamma = 0 on padded columns -> padded output columns are exactly 0.
    packed = jnp.zeros((8, d_pad), dtype=jnp.float32)
    packed = packed.at[0, :d_out].set(bias.astype(jnp.float32))
    packed = packed.at[1, :d_out].set(gamma.astype(jnp.float32))
    packed = packed.at[2, :d_out].set(beta.astype(jnp.float32))

    return {"wt": wt, "params": packed, "d_out": d_out, "d_pad": d_pad}


# ---------------------------------------------------------------------------
# Forward wrapper.
# ---------------------------------------------------------------------------
def fcunit_forward(x, params, slice_output=True):
    """x: (B, D_in) f32 (or bf16). Returns (B, D_out) f32
    (or (B, d_pad) when slice_output=False, zeros on padded columns)."""
    B, d_in = x.shape
    wt = params["wt"]
    d_out, d_pad = params["d_out"], params["d_pad"]

    tn = _pick_tile(d_pad, B, d_in)
    n_tiles = d_pad // tn

    # Cast x to bf16 once here (not per-tile inside the kernel).
    x_bf16 = x.astype(jnp.bfloat16)

    out_padded = pl.pallas_call(
        fcunit_kernel,
        out_shape=jax.ShapeDtypeStruct((B, d_pad), jnp.float32),
        grid_spec=pltpu.PrefetchScalarGridSpec(
            num_scalar_prefetch=0,
            grid=(n_tiles,),
            in_specs=[
                # x: same block every step -> single-buffer it.
                pl.BlockSpec((B, d_in), lambda j: (0, 0),
                             pipeline_mode=pl.Buffered(1)),
                pl.BlockSpec((d_in, tn), lambda j: (0, j)),   # weight slab
                pl.BlockSpec((8, tn), lambda j: (0, j)),      # bias/gamma/beta
            ],
            out_specs=pl.BlockSpec((B, tn), lambda j: (0, j)),
        ),
        compiler_params=pltpu.CompilerParams(
            dimension_semantics=("parallel",),       # megacore sharding on v7x
            vmem_limit_bytes=_SCOPED_VMEM_LIMIT,
        ),
    )(x_bf16, wt, params["params"])

    if slice_output and d_pad != d_out:
        # Extra HBM read+write; prefer slice_output=False and consume the
        # padded output downstream when possible.
        out_padded = out_padded[:, :d_out]
    return out_padded


# ---------------------------------------------------------------------------
# References.
# ---------------------------------------------------------------------------
def reference_forward_bf16(x, weight, bias, gamma, beta):
    """Matches kernel numerics: bf16 matmul operands, f32 everything else."""
    y = jnp.dot(x.astype(jnp.bfloat16), weight.T.astype(jnp.bfloat16),
                preferred_element_type=jnp.float32) + bias
    y = jnp.maximum(y, LEAKY_SLOPE * y)
    mean = jnp.mean(y, axis=0, keepdims=True)
    var = jnp.mean((y - mean) ** 2, axis=0, keepdims=True)
    return (y - mean) / jnp.sqrt(var + BN_EPS) * gamma + beta


def reference_forward_f32(x, weight, bias, gamma, beta):
    """Pure-f32 PyTorch-semantics reference (sanity check, looser tol)."""
    y = x @ weight.T + bias
    y = jnp.where(y > 0, y, LEAKY_SLOPE * y)
    mean = jnp.mean(y, axis=0, keepdims=True)
    var = jnp.mean((y - mean) ** 2, axis=0, keepdims=True)
    return (y - mean) / jnp.sqrt(var + BN_EPS) * gamma + beta


if __name__ == "__main__":
    key = jax.random.PRNGKey(0)
    k_x, k_w = jax.random.split(key)

    B, D_IN, D_OUT = 8, 32, 16
    INITRANGE = 0.1

    x = jax.random.normal(k_x, (B, D_IN), dtype=jnp.float32)

    # FCUnit.__init__: fc.weight ~ U(-initrange, initrange), fc.bias = 0,
    # bn.gamma = 1, bn.beta = 0.
    weight = jax.random.uniform(k_w, (D_OUT, D_IN), dtype=jnp.float32,
                                minval=-INITRANGE, maxval=INITRANGE)
    bias = jnp.zeros((D_OUT,), dtype=jnp.float32)
    gamma = jnp.ones((D_OUT,), dtype=jnp.float32)
    beta = jnp.zeros((D_OUT,), dtype=jnp.float32)

    params = prepare_fcunit_params(weight, bias, gamma, beta)  # once, at init
    out = fcunit_forward(x, params)
    jax.block_until_ready(out)

    assert out.shape == (B, D_OUT)

    ref_bf16 = reference_forward_bf16(x, weight, bias, gamma, beta)
    assert jnp.allclose(out, ref_bf16, atol=1e-3, rtol=1e-3), \
        "mismatch vs bf16-consistent reference"

    ref_f32 = reference_forward_f32(x, weight, bias, gamma, beta)
    assert jnp.allclose(out, ref_f32, atol=5e-2, rtol=5e-2), \
        "mismatch vs f32 module reference"

    print("KERNEL_OK")
</pallas_src>

<mosaic_0001>
module attributes {stable_mosaic.version = 11 : i64} {
  func.func @fcunit_kernel(%arg0: i32, %arg1: memref<8x32xbf16, #tpu.memory_space<vmem>>, %arg2: memref<32x128xbf16, #tpu.memory_space<vmem>>, %arg3: memref<8x128xf32, #tpu.memory_space<vmem>>, %arg4: memref<8x128xf32, #tpu.memory_space<vmem>>) attributes {dimension_semantics = [#tpu.dimension_semantics<parallel>], iteration_bounds = array<i64: 1>, scalar_prefetch = 0 : i64, scratch_operands = 0 : i64, tpu.core_type = #tpu.core_type<tc>, window_params = [{pipeline_mode = #tpu.pipeline_mode<synchronous>, transform_indices = @transform_0, window_bounds = array<i64: 8, 32>}, {transform_indices = @transform_1, window_bounds = array<i64: 32, 128>}, {transform_indices = @transform_2, window_bounds = array<i64: 8, 128>}, {transform_indices = @transform_3, window_bounds = array<i64: 8, 128>}]} {
    %c0 = arith.constant 0 : index
    %c0_0 = arith.constant 0 : index
    %0 = vector.load %arg1[%c0, %c0_0] : memref<8x32xbf16, #tpu.memory_space<vmem>>, vector<8x32xbf16>
    %c0_1 = arith.constant 0 : index
    %c0_2 = arith.constant 0 : index
    %1 = vector.load %arg2[%c0_1, %c0_2] : memref<32x128xbf16, #tpu.memory_space<vmem>>, vector<32x128xbf16>
    %cst = arith.constant dense<0.000000e+00> : vector<8x128xf32>
    %2 = tpu.matmul %0, %1, %cst {dimension_numbers = #tpu.dot_dimension_numbers<[1], [0], [0], [1], [0, 0, 1, 1], [], []>} : vector<8x32xbf16>, vector<32x128xbf16>, vector<8x128xf32> -> vector<8x128xf32>
    %c0_3 = arith.constant 0 : index
    %c0_4 = arith.constant 0 : index
    %3 = vector.load %arg3[%c0_3, %c0_4] : memref<8x128xf32, #tpu.memory_space<vmem>>, vector<8x128xf32>
    %4 = vector.extract_strided_slice %3 {offsets = [0, 0], sizes = [1, 128], strides = [1, 1]} : vector<8x128xf32> to vector<1x128xf32>
    %5 = vector.extract_strided_slice %3 {offsets = [1, 0], sizes = [1, 128], strides = [1, 1]} : vector<8x128xf32> to vector<1x128xf32>
    %6 = vector.extract_strided_slice %3 {offsets = [2, 0], sizes = [1, 128], strides = [1, 1]} : vector<8x128xf32> to vector<1x128xf32>
    %7 = vector.broadcast %4 : vector<1x128xf32> to vector<8x128xf32>
    %8 = arith.addf %2, %7 : vector<8x128xf32>
    %cst_5 = arith.constant 0.00999999977 : f32
    %9 = vector.broadcast %cst_5 : f32 to vector<8x128xf32>
    %10 = arith.mulf %9, %8 : vector<8x128xf32>
    %11 = arith.maximumf %8, %10 : vector<8x128xf32>
    %cst_6 = arith.constant dense<0.000000e+00> : vector<128xf32>
    %12 = vector.multi_reduction <add>, %11, %cst_6 [0] : vector<8x128xf32> to vector<128xf32>
    %13 = vector.shape_cast %12 : vector<128xf32> to vector<1x128xf32>
    %cst_7 = arith.constant 1.250000e-01 : f32
    %14 = vector.broadcast %cst_7 : f32 to vector<1x128xf32>
    %15 = arith.mulf %13, %14 : vector<1x128xf32>
    %16 = vector.broadcast %15 : vector<1x128xf32> to vector<8x128xf32>
    %17 = arith.subf %11, %16 : vector<8x128xf32>
    %18 = arith.mulf %17, %17 : vector<8x128xf32>
    %cst_8 = arith.constant dense<0.000000e+00> : vector<128xf32>
    %19 = vector.multi_reduction <add>, %18, %cst_8 [0] : vector<8x128xf32> to vector<128xf32>
    %20 = vector.shape_cast %19 : vector<128xf32> to vector<1x128xf32>
    %cst_9 = arith.constant 1.250000e-01 : f32
    %21 = vector.broadcast %cst_9 : f32 to vector<1x128xf32>
    %22 = arith.mulf %20, %21 : vector<1x128xf32>
    %cst_10 = arith.constant 9.99999974E-6 : f32
    %23 = vector.broadcast %cst_10 : f32 to vector<1x128xf32>
    %24 = arith.addf %22, %23 : vector<1x128xf32>
    %25 = math.rsqrt %24 : vector<1x128xf32>
    %26 = arith.mulf %5, %25 : vector<1x128xf32>
    %27 = vector.broadcast %26 : vector<1x128xf32> to vector<8x128xf32>
    %28 = arith.mulf %17, %27 : vector<8x128xf32>
    %29 = vector.broadcast %6 : vector<1x128xf32> to vector<8x128xf32>
    %30 = arith.addf %28, %29 : vector<8x128xf32>
    %c0_11 = arith.constant 0 : index
    %c0_12 = arith.constant 0 : index
    %31 = vector.load %arg4[%c0_11, %c0_12] : memref<8x128xf32, #tpu.memory_space<vmem>>, vector<8x128xf32>
    tpu.vector_store %arg4[%c0_11, %c0_12], %30 {strides = array<i32>} : memref<8x128xf32, #tpu.memory_space<vmem>>, vector<8x128xf32>,
    return
  }
  func.func @transform_0(%arg0: i32) -> (i32, i32) {
    %c0_i32 = arith.constant 0 : i32
    %c0_i32_0 = arith.constant 0 : i32
    %c0_i32_1 = arith.constant 0 : i32
    return %c0_i32, %c0_i32_0 : i32, i32
  }
  func.func @transform_1(%arg0: i32) -> (i32, i32) {
    %c0_i32 = arith.constant 0 : i32
    %c0_i32_0 = arith.constant 0 : i32
    return %c0_i32, %arg0 : i32, i32
  }
  func.func @transform_2(%arg0: i32) -> (i32, i32) {
    %c0_i32 = arith.constant 0 : i32
    %c0_i32_0 = arith.constant 0 : i32
    return %c0_i32, %arg0 : i32, i32
  }
  func.func @transform_3(%arg0: i32) -> (i32, i32) {
    %c0_i32 = arith.constant 0 : i32
    %c0_i32_0 = arith.constant 0 : i32
    return %c0_i32, %arg0 : i32, i32
  }
}

</mosaic_0001>

<llo_original>
// kernel: tpu_custom_call.1
$region0: #{tpu_custom_call.1}
  #allocation0 [shape = 'u32[]', space=smem, size = 0x4, offset = 0x4, fixed_abs, tag = 'smem constant byte address 0x4 - core index']
  #allocation1 [shape = 'u32[72,128]{1,0:T(1,128)}', space=vmem, size = 0x9000, scoped, tag = 'internal scratch']
  %s0 = inlined_call_operand.hbm [shape: bf16[8,32], index: 0, kind: input, shape index: {}]
  %s1 = inlined_call_operand.hbm [shape: bf16[32,128], index: 1, kind: input, shape index: {}]
  %s2 = inlined_call_operand.hbm [shape: f32[8,128], index: 2, kind: input, shape index: {}]
  %s3 = inlined_call_operand.hbm [shape: f32[8,128], index: 3, kind: output, shape index: {}]
  %s4 = sld [smem:[#allocation0]]
  $region34: #{tpu_custom_call.1} parent=0
    _
  %s6 = ssub.s32 1, %s4
  %s7 = scalar_select 0, %s6, %s4
  $region1: #{tpu_custom_call.1} parent=0
    #allocation2 [shape = 'u8[2048]{0}', space=vmem, size = 0x800, scoped, tag = 'input window, operand 0, single buffered']
    #allocation3 [shape = 's32[1]{0}', space=sflag, size = 0x4, scoped, tag = 'scoped memory for tpu_custom_call.1']
    #allocation4 [shape = 's32[1]{0}', space=sflag, size = 0x4, scoped, tag = 'scoped memory for tpu_custom_call.1']
    #allocation5 [shape = 'u8[8192]{0}', space=vmem, size = 0x2000, scoped, tag = 'input window, operand 1, single buffered']
    #allocation6 [shape = 's32[1]{0}', space=sflag, size = 0x4, scoped, tag = 'scoped memory for tpu_custom_call.1']
    #allocation7 [shape = 'u8[4096]{0}', space=vmem, size = 0x1000, scoped, tag = 'input window, operand 2, single buffered']
    #allocation8 [shape = 'u8[4096]{0}', space=vmem, size = 0x1000, scoped, tag = 'output window, operand 0, single buffered']
    %8 = vsyncpa [#allocation3], 0
    %9 = vsyncpa [#allocation6], 0
    %10 = vsyncpa [#allocation4], 0
    // Predicated region
    $region2: #{tpu_custom_call.1} parent=1 // pred_check
      _
    $region3: #{tpu_custom_call.1} parent=1 // pred_check_branch
      %12 = sbr.rel (0) target = $region5
    $region4: #{tpu_custom_call.1} parent=1 // pred_region
      %14 = vsyncadd [#allocation3], 0
      %s16 = sshll.u32 %s0, 4
      %s17 = int_to_ptr.hbm [resolvable:$true] %s16
      %s18 = sshll.u32 [#allocation2], 4
      %s19 = int_to_ptr.vmem [resolvable:$true] %s18
      %21 = dma.hbm_to_vmem [thread:$0]  %s17, 64, %s19, [#allocation3]
    $region5: #{tpu_custom_call.1} parent=1 // pred_fallthru
      _
    // Predicated region
    $region6: #{tpu_custom_call.1} parent=1 // pred_check
      _
    $region7: #{tpu_custom_call.1} parent=1 // pred_check_branch
      %23 = sbr.rel (0) target = $region9
    $region8: #{tpu_custom_call.1} parent=1 // pred_region
      %25 = vsyncadd [#allocation6], 0
      %s26 = sshll.u32 %s1, 4
      %s27 = int_to_ptr.hbm [resolvable:$true] %s26
      %s28 = sshll.u32 [#allocation5], 4
      %s29 = int_to_ptr.vmem [resolvable:$true] %s28
      %34 = dma.hbm_to_vmem [thread:$0]  %s27, 256, %s29, [#allocation6], 64, 64, 4
    $region9: #{tpu_custom_call.1} parent=1 // pred_fallthru
      _
    // Predicated region
    $region10: #{tpu_custom_call.1} parent=1 // pred_check
      _
    $region11: #{tpu_custom_call.1} parent=1 // pred_check_branch
      %36 = sbr.rel (0) target = $region13
    $region12: #{tpu_custom_call.1} parent=1 // pred_region
      %38 = vsyncadd [#allocation6], 0
      %s40 = sshll.u32 %s2, 4
      %s41 = int_to_ptr.hbm [resolvable:$true] %s40
      %s42 = sshll.u32 [#allocation7], 4
      %s43 = int_to_ptr.vmem [resolvable:$true] %s42
      %45 = dma.hbm_to_vmem [thread:$0]  %s41, 128, %s43, [#allocation6]
    $region13: #{tpu_custom_call.1} parent=1 // pred_fallthru
      _
    // Predicated region
    $region14: #{tpu_custom_call.1} parent=1 // pred_check
      _
    $region15: #{tpu_custom_call.1} parent=1 // pred_check_branch
      %47 = sbr.rel (0) target = $region17
    $region16: #{tpu_custom_call.1} parent=1 // pred_region
      %49 = dma.done [#allocation3], 64
    $region17: #{tpu_custom_call.1} parent=1 // pred_fallthru
      _
    // Predicated region
    $region18: #{tpu_custom_call.1} parent=1 // pred_check
      _
    $region19: #{tpu_custom_call.1} parent=1 // pred_check_branch
      %51 = sbr.rel (0) target = $region21
    $region20: #{tpu_custom_call.1} parent=1 // pred_region
      %53 = dma.done [#allocation6], 256
    $region21: #{tpu_custom_call.1} parent=1 // pred_fallthru
      _
    // Predicated region
    $region22: #{tpu_custom_call.1} parent=1 // pred_check
      _
    $region23: #{tpu_custom_call.1} parent=1 // pred_check_branch
      %55 = sbr.rel (0) target = $region25
    $region24: #{tpu_custom_call.1} parent=1 // pred_region
      %57 = dma.done [#allocation6], 128
    $region25: #{tpu_custom_call.1} parent=1 // pred_fallthru
      _
    %v59 = vld [vmem:[#allocation2] sm:$0xf]
    %v60 = vld [vmem:[#allocation5] sm:$0xf]
    %v61 = vld [vmem:[#allocation5 + $0x4] sm:$0xf]
    %v62 = vld [vmem:[#allocation5 + $0x8] sm:$0xf]
    %v63 = vld [vmem:[#allocation5 + $0xc] sm:$0xf]
    %v64 = vld [vmem:[#allocation7] sm:$0xff]
    %v65 = vperm.slane %v64, 0
    %v70 = vunpack.c.l.b16 %v60
    %v71 = vunpack.c.l.b16 %v61
    %v72 = vunpack.c.l.b16 %v62
    %v73 = vunpack.c.l.b16 %v63
    %v74 = vpack.c.b16 %v71, %v70
    %v75 = vpack.c.b16 %v73, %v72
    %vm78 = vcmask 261120
    %v80 = vsel %vm78, %v59, 0
    %82 = vmatpush.bf16.msra.mxu0 0
    %83 = vmatpush.bf16.msra.mxu0 0
    %84 = vmatpush.bf16.msra.mxu0 0
    %85 = vmatpush.bf16.msra.mxu0 0
    %86 = vmatpush.bf16.msra.mxu0 0
    %87 = vmatpush.bf16.msra.mxu0 0
    %88 = vmatpush.bf16.msra.mxu0 %v75
    %89 = vmatpush.bf16.msra.mxu0 %v74
    %90 = vmatmul.bf16.gmra.mxu0 %v80
    %v91 = vpop.f32.mrf.mxu0
    %v92 = vadd.f32 %v65, %v91
    %v93 = vpop.f32.mrf.mxu0
    %94 = vdwg.mxu0
    %v95 = vmul.f32 %v92, 0.01
    %v96 = vmax.f32 %v92, %v95
    %v97 = vrot.slane %v96, 4
    %v98 = vadd.f32 %v96, %v97
    %v99 = vrot.slane %v98, 2
    %v100 = vadd.f32 %v98, %v99
    %v101 = vrot.slane %v100, 1
    %v102 = vadd.f32 %v100, %v101
    %v103 = vmul.f32 %v102, 0.125
    %v104 = vsub.f32 %v96, %v103
    %v105 = vmul.f32 %v104, %v104
    %v106 = vrot.slane %v105, 4
    %v107 = vadd.f32 %v105, %v106
    %v108 = vrot.slane %v107, 2
    %v109 = vadd.f32 %v107, %v108
    %v110 = vrot.slane %v109, 1
    %v111 = vadd.f32 %v109, %v110
    %v112 = vmul.f32 %v111, 0.125
    %v113 = vadd.f32 %v112, 1e-05
    %v114 = vrsqrt.pop %v113
    %v115 = vmul.f32 %v114, %v113
    %v116 = vmul.f32 %v115, %v114
    %v117 = vmul.f32 0.5, %v116
    %v118 = vsub.f32 1.5, %v117
    %v119 = vmul.f32 %v114, %v118
    %vm120 = vweird.f32 %v113
    %vm121 = vweird.f32 %v114
    %vm122 = vmor %vm120, %vm121
    %v123 = vsel %vm122, %v114, %v119
    %v124 = vmul.f32 %v64, %v123
    %v125 = vperm.slane %v124, 1
    %v126 = vmul.f32 %v104, %v125
    %v127 = vperm.slane %v64, 2
    %v128 = vadd.f32 %v126, %v127
    %129 = vst [vmem:[#allocation8] sm:$0xff] %v128
    // Predicated region
    $region26: #{tpu_custom_call.1} parent=1 // pred_check
      _
    $region27: #{tpu_custom_call.1} parent=1 // pred_check_branch
      %131 = sbr.rel (0) target = $region29
    $region28: #{tpu_custom_call.1} parent=1 // pred_region
      %133 = vsyncadd [#allocation4], 0
      %s135 = sshll.u32 [#allocation8], 4
      %s136 = int_to_ptr.vmem [resolvable:$true] %s135
      %s137 = sshll.u32 %s3, 4
      %s138 = int_to_ptr.hbm [resolvable:$true] %s137
      %140 = dma.vmem_to_hbm [thread:$0]  %s136, 128, %s138, [#allocation4]
    $region29: #{tpu_custom_call.1} parent=1 // pred_fallthru
      _
    // Predicated region
    $region30: #{tpu_custom_call.1} parent=1 // pred_check
      _
    $region31: #{tpu_custom_call.1} parent=1 // pred_check_branch
      %142 = sbr.rel (0) target = $region33
    $region32: #{tpu_custom_call.1} parent=1 // pred_region
      %144 = dma.done [#allocation4], 128
    $region33: #{tpu_custom_call.1} parent=1 // pred_fallthru
      _
    %145 = vsyncpa [#allocation3], 1
    %146 = vsyncpa [#allocation6], 1
    %147 = vsyncpa [#allocation4], 1

</llo_original>
